<compile_context>
chip_gen: v6e
topology: v6e:2x2x1
jax: 0.10.0
libtpu: 0.0.40
codegen_flags: <defaults>
</compile_context>

<pallas_src>
import functools

import jax
import jax.numpy as jnp
from jax.experimental import pallas as pl
from jax.experimental.pallas import tpu as pltpu


def _sobel_kernel(x_ref, gx_ref, gy_ref, *, H, W):
    """x_ref: (TB, H*W) block; each row is one row-major flattened (H, W) image."""
    f = x_ref[...].astype(jnp.float32)
    TB, HW = f.shape

    # Edge masks -- one iota + a handful of VPU compares per vreg.
    col = jax.lax.broadcasted_iota(jnp.int32, (TB, HW), 1)
    jcol = col % W                        # column inside the image (AND for pow2 W)
    at_left_edge = jcol == 0
    at_right_edge = jcol == W - 1

    # ---- vertical neighbours: lane rotation by W (XLU), select at the edge --
    if H > 1:
        is_first_row = col < W
        is_last_row = col >= HW - W
        # p[i-1] with row-0 replication (roll wrap is masked away).
        up = jnp.where(is_first_row, f, pltpu.roll(f, W, axis=1))
        # p[i+1]; past the last row the reference uses 2*p[H-1] - p[H-2],
        # which equals 2*f - up there, so no separate extrapolated strip.
        down = jnp.where(is_last_row, 2.0 * f - up, pltpu.roll(f, HW - W, axis=1))
    else:
        up = f
        down = f                          # 2*row0 - row0 == row0

    s = up + 2.0 * f + down               # vertical  [1, 2, 1]
    d = down - up                         # vertical  [-1, 0, 1]
    # f / up / down are dead from here on (keeps live vregs low).

    # ---- horizontal neighbours: rotation by 1 lane, per-image edge repl. ----
    def left(a):                          # a[..., j-1]
        return a if W == 1 else jnp.where(at_left_edge, a, pltpu.roll(a, 1, axis=1))

    def right(a):                         # a[..., j+1]
        return a if W == 1 else jnp.where(at_right_edge, a, pltpu.roll(a, HW - 1, axis=1))

    # Finish (and store) gx before starting gy to keep live temporaries low.
    gx_ref[...] = ((right(s) - left(s)) * 0.125).astype(gx_ref.dtype)            # [-1,0,1]
    gy_ref[...] = ((left(d) + 2.0 * d + right(d)) * 0.125).astype(gy_ref.dtype)  # [1,2,1]


def _choose_block_rows(n, hw, *, itemsize=4, target_bytes=2 << 20, min_steps=2):
    """Rows of the flattened (N, H*W) view per grid step.

    ~2 MiB blocks amortize the ~0.35 us per-step fixed cost to a few percent
    of the HBM time on all generations, while 3 double-buffered I/O blocks
    plus the in-kernel f32 temporaries stay well inside a 48 MiB VMEM budget
    (v7x has only 64 MiB physical).  The row count is a multiple of 8
    (sublane tile) unless it covers the whole array, and is capped so the grid
    has at least `min_steps` steps when n permits (both v7x TensorCores
    engage, DMA overlaps compute).
    """
    row_bytes = hw * max(int(itemsize), 4)      # in-kernel temporaries are f32
    tb = max(1, target_bytes // row_bytes)
    cap = max(8, ((n // min_steps) // 8) * 8)
    tb = min(tb, cap)
    if tb >= n:
        return n
    return max(8, (tb // 8) * 8)


def sobel_grad(img, *, target_bytes=2 << 20):
    """img: (B, C, H, W) float array.  Returns (grad_x, grad_y), same shape/dtype."""
    B, C, H, W = img.shape
    N, HW = B * C, H * W
    x2 = img.reshape(N, HW)                     # free reshape; row n = one image

    TB = _choose_block_rows(
        N, HW, itemsize=jnp.dtype(img.dtype).itemsize, target_bytes=target_bytes)
    grid = (pl.cdiv(N, TB),)
    # TODO(synk): for very large images (a single (8, H*W) f32 strip beyond the
    # VMEM budget), additionally tile along H with a 1-row halo.
    # TODO(synk): emitting bf16 gx/gy (keeping f32 accumulation in-kernel) would
    # cut HBM write traffic ~2x if downstream consumers accept it.

    gx, gy = pl.pallas_call(
        functools.partial(_sobel_kernel, H=H, W=W),
        out_shape=(jax.ShapeDtypeStruct((N, HW), img.dtype),
                   jax.ShapeDtypeStruct((N, HW), img.dtype)),
        grid_spec=pltpu.PrefetchScalarGridSpec(
            num_scalar_prefetch=0,
            grid=grid,
            in_specs=[pl.BlockSpec((TB, HW), lambda i: (i, 0))],
            out_specs=[pl.BlockSpec((TB, HW), lambda i: (i, 0)),
                       pl.BlockSpec((TB, HW), lambda i: (i, 0))],
        ),
        compiler_params=pltpu.CompilerParams(
            dimension_semantics=("parallel",),
            vmem_limit_bytes=48 * 1024 * 1024,
        ),
    )(x2)
    return gx.reshape(B, C, H, W), gy.reshape(B, C, H, W)


def _sobel_ref(img):
    """Pure-JAX reference mirroring the PyTorch forward exactly (3x3 taps)."""
    B, C, H, W = img.shape
    kern_x = jnp.array([[-1.0, 0.0, 1.0],
                        [-2.0, 0.0, 2.0],
                        [-1.0, 0.0, 1.0]], dtype=jnp.float32) / 8.0
    kern_y = kern_x.T
    pad = jnp.pad(img.astype(jnp.float32),
                  ((0, 0), (0, 0), (1, 1), (1, 1)), mode="edge")
    pad = pad.at[:, :, -1, :].set(2.0 * pad[:, :, -2, :] - pad[:, :, -3, :])
    gx = jnp.zeros(img.shape, jnp.float32)
    gy = jnp.zeros(img.shape, jnp.float32)
    for di in range(3):
        for dj in range(3):
            win = pad[:, :, di:di + H, dj:dj + W]
            gx = gx + kern_x[di, dj] * win
            gy = gy + kern_y[di, dj] * win
    return gx.astype(img.dtype), gy.astype(img.dtype)


if __name__ == "__main__":
    key = jax.random.PRNGKey(0)
    # Small NCHW input consistent with the module's forward.
    img = jax.random.normal(key, (2, 4, 16, 16), dtype=jnp.float32)

    gx, gy = sobel_grad(img)
    jax.block_until_ready((gx, gy))

    rgx, rgy = _sobel_ref(img)
    assert gx.shape == img.shape and gy.shape == img.shape
    assert jnp.allclose(gx, rgx, atol=1e-5, rtol=1e-5)
    assert jnp.allclose(gy, rgy, atol=1e-5, rtol=1e-5)

    # Second small case that exercises a multi-step grid (N=32 -> TB=16, 2 steps).
    img2 = jax.random.normal(jax.random.PRNGKey(1), (4, 8, 16, 16), dtype=jnp.float32)
    gx2, gy2 = sobel_grad(img2)
    jax.block_until_ready((gx2, gy2))
    rgx2, rgy2 = _sobel_ref(img2)
    assert jnp.allclose(gx2, rgx2, atol=1e-5, rtol=1e-5)
    assert jnp.allclose(gy2, rgy2, atol=1e-5, rtol=1e-5)

    print("KERNEL_OK")
</pallas_src>

<mosaic_0001>
module attributes {stable_mosaic.version = 11 : i64} {
  func.func @_sobel_kernel(%arg0: i32, %arg1: memref<8x256xf32, #tpu.memory_space<vmem>>, %arg2: memref<8x256xf32, #tpu.memory_space<vmem>>, %arg3: memref<8x256xf32, #tpu.memory_space<vmem>>) attributes {dimension_semantics = [#tpu.dimension_semantics<parallel>], iteration_bounds = array<i64: 1>, scalar_prefetch = 0 : i64, scratch_operands = 0 : i64, tpu.core_type = #tpu.core_type<tc>, window_params = [{transform_indices = @transform_0, window_bounds = array<i64: 8, 256>}, {transform_indices = @transform_1, window_bounds = array<i64: 8, 256>}, {transform_indices = @transform_2, window_bounds = array<i64: 8, 256>}]} {
    %c0 = arith.constant 0 : index
    %c0_0 = arith.constant 0 : index
    %0 = vector.load %arg1[%c0, %c0_0] : memref<8x256xf32, #tpu.memory_space<vmem>>, vector<8x256xf32>
    %1 = tpu.iota {dimensions = array<i32: 1>} : vector<8x256xi32>
    %c16_i32 = arith.constant 16 : i32
    %c0_i32 = arith.constant 0 : i32
    %2 = arith.cmpi eq, %c16_i32, %c0_i32 : i32
    %c1_i32 = arith.constant 1 : i32
    %3 = arith.select %2, %c1_i32, %c16_i32 : i32
    %4 = vector.broadcast %3 : i32 to vector<8x256xi32>
    %5 = arith.remsi %1, %4 : vector<8x256xi32>
    %c0_i32_1 = arith.constant 0 : i32
    %6 = vector.broadcast %c0_i32_1 : i32 to vector<8x256xi32>
    %7 = arith.cmpi ne, %5, %6 : vector<8x256xi32>
    %c0_i32_2 = arith.constant 0 : i32
    %8 = vector.broadcast %c0_i32_2 : i32 to vector<8x256xi32>
    %9 = arith.cmpi slt, %5, %8 : vector<8x256xi32>
    %c0_i32_3 = arith.constant 0 : i32
    %10 = arith.cmpi slt, %3, %c0_i32_3 : i32
    %11 = vector.broadcast %10 : i1 to vector<8x256xi1>
    %12 = vector.broadcast %11 : vector<8x256xi1> to vector<8x256xi1>
    %13 = arith.xori %9, %12 : vector<8x256xi1>
    %14 = arith.andi %13, %7 : vector<8x256xi1>
    %15 = vector.broadcast %3 : i32 to vector<8x256xi32>
    %16 = arith.addi %5, %15 : vector<8x256xi32>
    %17 = arith.select %14, %16, %5 : vector<8x256xi1>, vector<8x256xi32>
    %c0_i32_4 = arith.constant 0 : i32
    %18 = vector.broadcast %c0_i32_4 : i32 to vector<8x256xi32>
    %19 = arith.cmpi eq, %17, %18 : vector<8x256xi32>
    %c15_i32 = arith.constant 15 : i32
    %20 = vector.broadcast %c15_i32 : i32 to vector<8x256xi32>
    %21 = arith.cmpi eq, %17, %20 : vector<8x256xi32>
    %c16_i32_5 = arith.constant 16 : i32
    %22 = vector.broadcast %c16_i32_5 : i32 to vector<8x256xi32>
    %23 = arith.cmpi slt, %1, %22 : vector<8x256xi32>
    %c240_i32 = arith.constant 240 : i32
    %24 = vector.broadcast %c240_i32 : i32 to vector<8x256xi32>
    %25 = arith.cmpi sge, %1, %24 : vector<8x256xi32>
    %c16_i32_6 = arith.constant 16 : i32
    %26 = tpu.dynamic_rotate %0 by %c16_i32_6 dim 1 : vector<8x256xf32>, i32 -> vector<8x256xf32>
    %27 = arith.select %23, %0, %26 : vector<8x256xi1>, vector<8x256xf32>
    %cst = arith.constant 2.000000e+00 : f32
    %28 = vector.broadcast %cst : f32 to vector<8x256xf32>
    %29 = arith.mulf %28, %0 : vector<8x256xf32>
    %30 = arith.subf %29, %27 : vector<8x256xf32>
    %c240_i32_7 = arith.constant 240 : i32
    %31 = tpu.dynamic_rotate %0 by %c240_i32_7 dim 1 : vector<8x256xf32>, i32 -> vector<8x256xf32>
    %32 = arith.select %25, %30, %31 : vector<8x256xi1>, vector<8x256xf32>
    %cst_8 = arith.constant 2.000000e+00 : f32
    %33 = vector.broadcast %cst_8 : f32 to vector<8x256xf32>
    %34 = arith.mulf %33, %0 : vector<8x256xf32>
    %35 = arith.addf %27, %34 : vector<8x256xf32>
    %36 = arith.addf %35, %32 : vector<8x256xf32>
    %37 = arith.subf %32, %27 : vector<8x256xf32>
    %c255_i32 = arith.constant 255 : i32
    %38 = tpu.dynamic_rotate %36 by %c255_i32 dim 1 : vector<8x256xf32>, i32 -> vector<8x256xf32>
    %39 = arith.select %21, %36, %38 : vector<8x256xi1>, vector<8x256xf32>
    %c1_i32_9 = arith.constant 1 : i32
    %40 = tpu.dynamic_rotate %36 by %c1_i32_9 dim 1 : vector<8x256xf32>, i32 -> vector<8x256xf32>
    %41 = arith.select %19, %36, %40 : vector<8x256xi1>, vector<8x256xf32>
    %42 = arith.subf %39, %41 : vector<8x256xf32>
    %cst_10 = arith.constant 1.250000e-01 : f32
    %43 = vector.broadcast %cst_10 : f32 to vector<8x256xf32>
    %44 = arith.mulf %42, %43 : vector<8x256xf32>
    %c0_11 = arith.constant 0 : index
    %c0_12 = arith.constant 0 : index
    %45 = vector.load %arg2[%c0_11, %c0_12] : memref<8x256xf32, #tpu.memory_space<vmem>>, vector<8x256xf32>
    tpu.vector_store %arg2[%c0_11, %c0_12], %44 {strides = array<i32>} : memref<8x256xf32, #tpu.memory_space<vmem>>, vector<8x256xf32>,
    %c1_i32_13 = arith.constant 1 : i32
    %46 = tpu.dynamic_rotate %37 by %c1_i32_13 dim 1 : vector<8x256xf32>, i32 -> vector<8x256xf32>
    %47 = arith.select %19, %37, %46 : vector<8x256xi1>, vector<8x256xf32>
    %cst_14 = arith.constant 2.000000e+00 : f32
    %48 = vector.broadcast %cst_14 : f32 to vector<8x256xf32>
    %49 = arith.mulf %48, %37 : vector<8x256xf32>
    %50 = arith.addf %47, %49 : vector<8x256xf32>
    %c255_i32_15 = arith.constant 255 : i32
    %51 = tpu.dynamic_rotate %37 by %c255_i32_15 dim 1 : vector<8x256xf32>, i32 -> vector<8x256xf32>
    %52 = arith.select %21, %37, %51 : vector<8x256xi1>, vector<8x256xf32>
    %53 = arith.addf %50, %52 : vector<8x256xf32>
    %cst_16 = arith.constant 1.250000e-01 : f32
    %54 = vector.broadcast %cst_16 : f32 to vector<8x256xf32>
    %55 = arith.mulf %53, %54 : vector<8x256xf32>
    %c0_17 = arith.constant 0 : index
    %c0_18 = arith.constant 0 : index
    %56 = vector.load %arg3[%c0_17, %c0_18] : memref<8x256xf32, #tpu.memory_space<vmem>>, vector<8x256xf32>
    tpu.vector_store %arg3[%c0_17, %c0_18], %55 {strides = array<i32>} : memref<8x256xf32, #tpu.memory_space<vmem>>, vector<8x256xf32>,
    return
  }
  func.func @transform_0(%arg0: i32) -> (i32, i32) {
    %c0_i32 = arith.constant 0 : i32
    %c0_i32_0 = arith.constant 0 : i32
    return %arg0, %c0_i32 : i32, i32
  }
  func.func @transform_1(%arg0: i32) -> (i32, i32) {
    %c0_i32 = arith.constant 0 : i32
    %c0_i32_0 = arith.constant 0 : i32
    return %arg0, %c0_i32 : i32, i32
  }
  func.func @transform_2(%arg0: i32) -> (i32, i32) {
    %c0_i32 = arith.constant 0 : i32
    %c0_i32_0 = arith.constant 0 : i32
    return %arg0, %c0_i32 : i32, i32
  }
}

</mosaic_0001>

<llo_original>
// kernel: tpu_custom_call.1
$region0: #{tpu_custom_call.1}
  #allocation0 [shape = 'u32[]', space=smem, size = 0x4, offset = 0x4, fixed_abs, tag = 'smem constant byte address 0x4 - core index']
  #allocation1 [shape = 'u32[144,128]{1,0:T(1,128)}', space=vmem, size = 0x12000, scoped, tag = 'internal scratch']
  %s0 = inlined_call_operand.hbm [shape: f32[8,256], index: 0, kind: input, shape index: {}]
  %s1 = inlined_call_operand.hbm [shape: f32[8,256], index: 1, kind: output, shape index: {0}]
  %s2 = inlined_call_operand.hbm [shape: f32[8,256], index: 2, kind: output, shape index: {1}]
  %3 = xla_tuple %s1, %s2
  %s4 = sld [smem:[#allocation0]]
  $region26: #{tpu_custom_call.1} parent=0
    _
  %s6 = ssub.s32 1, %s4
  %s7 = scalar_select 0, %s6, %s4
  $region1: #{tpu_custom_call.1} parent=0
    #allocation2 [shape = 'u8[8192]{0}', space=vmem, size = 0x2000, scoped, tag = 'input window, operand 0, single buffered']
    #allocation3 [shape = 's32[1]{0}', space=sflag, size = 0x4, scoped, tag = 'scoped memory for tpu_custom_call.1']
    #allocation4 [shape = 's32[1]{0}', space=sflag, size = 0x4, scoped, tag = 'scoped memory for tpu_custom_call.1']
    #allocation5 [shape = 'u8[8192]{0}', space=vmem, size = 0x2000, scoped, tag = 'output window, operand 0, single buffered']
    #allocation6 [shape = 'u8[8192]{0}', space=vmem, size = 0x2000, scoped, tag = 'output window, operand 1, single buffered']
    #allocation7 [shape = 's32[1]{0}', space=sflag, size = 0x4, scoped, tag = 'scoped memory for tpu_custom_call.1']
    %8 = vsyncpa [#allocation3], 0
    %9 = vsyncpa [#allocation4], 0
    %10 = vsyncpa [#allocation7], 0
    // Predicated region
    $region2: #{tpu_custom_call.1} parent=1 // pred_check
      _
    $region3: #{tpu_custom_call.1} parent=1 // pred_check_branch
      %12 = sbr.rel (0) target = $region5
    $region4: #{tpu_custom_call.1} parent=1 // pred_region
      %s14 = ssub.s32 256, 256
      %15 = vsyncadd [#allocation3], %s14
      %s17 = sshll.u32 [#allocation2], 4
      %s18 = int_to_ptr.vmem [resolvable:$true] %s17
      %20 = dma.hbm_to_vmem [thread:$0]  %s0, 256, %s18, [#allocation3]
    $region5: #{tpu_custom_call.1} parent=1 // pred_fallthru
      _
    // Predicated region
    $region6: #{tpu_custom_call.1} parent=1 // pred_check
      _
    $region7: #{tpu_custom_call.1} parent=1 // pred_check_branch
      %22 = sbr.rel (0) target = $region9
    $region8: #{tpu_custom_call.1} parent=1 // pred_region
      %23 = dma.done [#allocation3], 256
    $region9: #{tpu_custom_call.1} parent=1 // pred_fallthru
      _
    %v24 = vld [vmem:[#allocation2] sm:$0xff]
    %v25 = vld [vmem:[#allocation2 + $0x8] sm:$0xff]
    %v26 = vlaneseq
    %v27 = vand.u32 %v26, 127
    %v28 = vadd.s32 %v27, 128
    %vm29 = vcmp.lt.s32.totalorder %v27, 0
    %v30 = vsub.s32 0, %v27
    %v31 = vsel %vm29, %v30, %v27
    %v32 = vshrl.u32 %v31, 4
    %v33 = vand.u32 %v31, 15
    %v34 = vsub.s32 0, %v33
    %v35 = vsel %vm29, %v34, %v33
    %vm36 = vcmp.lt.s32.totalorder %v28, 0
    %v37 = vsub.s32 0, %v28
    %v38 = vsel %vm36, %v37, %v28
    %v39 = vshrl.u32 %v38, 4
    %v40 = vand.u32 %v38, 15
    %v41 = vsub.s32 0, %v40
    %v42 = vsel %vm36, %v41, %v40
    %vm43 = vcmp.ne.s32.totalorder %v35, 0
    %vm44 = vcmp.ne.s32.totalorder %v42, 0
    %vm45 = vcmp.lt.s32.totalorder %v35, 0
    %vm46 = vcmp.lt.s32.totalorder %v42, 0
    %vm47 = vmand %vm45, %vm43
    %vm48 = vmand %vm46, %vm44
    %v49 = vadd.s32 %v35, 16
    %v50 = vadd.s32 %v42, 16
    %v51 = vsel %vm47, %v49, %v35
    %v52 = vsel %vm48, %v50, %v42
    %vm53 = vcmp.eq.s32.totalorder %v51, 0
    %vm54 = vcmp.eq.s32.totalorder %v52, 0
    %vm55 = vcmp.eq.s32.totalorder %v51, 15
    %vm56 = vcmp.eq.s32.totalorder %v52, 15
    %vm57 = vcmp.lt.s32.totalorder %v27, 16
    %vm58 = vcmp.lt.s32.totalorder %v28, 16
    %vm59 = vcmp.ge.s32.totalorder %v27, 240
    %vm60 = vcmp.ge.s32.totalorder %v28, 240
    %61 = vrot.lane.b32.xlu0 %v24, 16
    %v62 = vpop.permute.xlu0 %61
    %63 = vrot.lane.b32.xlu0 %v25, 16
    %v64 = vpop.permute.xlu0 %63
    %v65 = vsel %vm57, %v62, %v64
    %v66 = vsel %vm57, %v64, %v62
    %v67 = vsel %vm57, %v24, %v66
    %v68 = vsel %vm58, %v25, %v65
    %v69 = vmul.f32 %v24, 2.0
    %v70 = vmul.f32 %v25, 2.0
    %v71 = vsub.f32 %v69, %v67
    %v72 = vsub.f32 %v70, %v68
    %73 = vrot.lane.b32.xlu0 %v24, 112
    %v74 = vpop.permute.xlu0 %73
    %75 = vrot.lane.b32.xlu0 %v25, 112
    %v76 = vpop.permute.xlu0 %75
    %vm77 = vcmp.lt.s32.totalorder %v27, 112
    %v78 = vsel %vm77, %v74, %v76
    %v79 = vsel %vm77, %v76, %v74
    %v80 = vsel %vm59, %v71, %v78
    %v81 = vsel %vm60, %v72, %v79
    %v82 = vadd.f32 %v67, %v69
    %v83 = vadd.f32 %v68, %v70
    %v84 = vadd.f32 %v82, %v80
    %v85 = vadd.f32 %v83, %v81
    %v86 = vsub.f32 %v80, %v67
    %v87 = vsub.f32 %v81, %v68
    %88 = vrot.lane.b32.xlu0 %v84, 127
    %v89 = vpop.permute.xlu0 %88
    %90 = vrot.lane.b32.xlu0 %v85, 127
    %v91 = vpop.permute.xlu0 %90
    %vm92 = vcmp.lt.s32.totalorder %v27, 127
    %v93 = vsel %vm92, %v89, %v91
    %v94 = vsel %vm92, %v91, %v89
    %v95 = vsel %vm55, %v84, %v93
    %v96 = vsel %vm56, %v85, %v94
    %97 = vrot.lane.b32.xlu0 %v84, 1
    %v98 = vpop.permute.xlu0 %97
    %99 = vrot.lane.b32.xlu0 %v85, 1
    %v100 = vpop.permute.xlu0 %99
    %vm101 = vcmp.lt.s32.totalorder %v27, 1
    %v102 = vsel %vm101, %v98, %v100
    %v103 = vsel %vm101, %v100, %v98
    %v104 = vsel %vm53, %v84, %v103
    %v105 = vsel %vm54, %v85, %v102
    %v106 = vsub.f32 %v95, %v104
    %v107 = vsub.f32 %v96, %v105
    %v108 = vmul.f32 %v106, 0.125
    %v109 = vmul.f32 %v107, 0.125
    %110 = vst [vmem:[#allocation5] sm:$0xff] %v108
    %111 = vst [vmem:[#allocation5 + $0x8] sm:$0xff] %v109
    %112 = vrot.lane.b32.xlu0 %v86, 1
    %v113 = vpop.permute.xlu0 %112
    %114 = vrot.lane.b32.xlu0 %v87, 1
    %v115 = vpop.permute.xlu0 %114
    %v116 = vsel %vm101, %v113, %v115
    %v117 = vsel %vm101, %v115, %v113
    %v118 = vsel %vm53, %v86, %v117
    %v119 = vsel %vm54, %v87, %v116
    %v120 = vmul.f32 %v86, 2.0
    %v121 = vmul.f32 %v87, 2.0
    %v122 = vadd.f32 %v118, %v120
    %v123 = vadd.f32 %v119, %v121
    %124 = vrot.lane.b32.xlu0 %v86, 127
    %v125 = vpop.permute.xlu0 %124
    %126 = vrot.lane.b32.xlu0 %v87, 127
    %v127 = vpop.permute.xlu0 %126
    %v128 = vsel %vm92, %v125, %v127
    %v129 = vsel %vm92, %v127, %v125
    %v130 = vsel %vm55, %v86, %v128
    %v131 = vsel %vm56, %v87, %v129
    %v132 = vadd.f32 %v122, %v130
    %v133 = vadd.f32 %v123, %v131
    %v134 = vmul.f32 %v132, 0.125
    %v135 = vmul.f32 %v133, 0.125
    %136 = vst [vmem:[#allocation6] sm:$0xff] %v134
    %137 = vst [vmem:[#allocation6 + $0x8] sm:$0xff] %v135
    // Predicated region
    $region10: #{tpu_custom_call.1} parent=1 // pred_check
      _
    $region11: #{tpu_custom_call.1} parent=1 // pred_check_branch
      %139 = sbr.rel (0) target = $region13
    $region12: #{tpu_custom_call.1} parent=1 // pred_region
      %s141 = ssub.s32 256, 256
      %142 = vsyncadd [#allocation4], %s141
      %s144 = sshll.u32 [#allocation5], 4
      %s145 = int_to_ptr.vmem [resolvable:$true] %s144
      %147 = dma.vmem_to_hbm [thread:$0]  %s145, 256, %s1, [#allocation4]
    $region13: #{tpu_custom_call.1} parent=1 // pred_fallthru
      _
    // Predicated region
    $region14: #{tpu_custom_call.1} parent=1 // pred_check
      _
    $region15: #{tpu_custom_call.1} parent=1 // pred_check_branch
      %149 = sbr.rel (0) target = $region17
    $region16: #{tpu_custom_call.1} parent=1 // pred_region
      %s151 = ssub.s32 256, 256
      %152 = vsyncadd [#allocation7], %s151
      %s154 = sshll.u32 [#allocation6], 4
      %s155 = int_to_ptr.vmem [resolvable:$true] %s154
      %157 = dma.vmem_to_hbm [thread:$0]  %s155, 256, %s2, [#allocation7]
    $region17: #{tpu_custom_call.1} parent=1 // pred_fallthru
      _
    // Predicated region
    $region18: #{tpu_custom_call.1} parent=1 // pred_check
      _
    $region19: #{tpu_custom_call.1} parent=1 // pred_check_branch
      %159 = sbr.rel (0) target = $region21
    $region20: #{tpu_custom_call.1} parent=1 // pred_region
      %160 = dma.done [#allocation4], 256
    $region21: #{tpu_custom_call.1} parent=1 // pred_fallthru
      _
    // Predicated region
    $region22: #{tpu_custom_call.1} parent=1 // pred_check
      _
    $region23: #{tpu_custom_call.1} parent=1 // pred_check_branch
      %162 = sbr.rel (0) target = $region25
    $region24: #{tpu_custom_call.1} parent=1 // pred_region
      %163 = dma.done [#allocation7], 256
    $region25: #{tpu_custom_call.1} parent=1 // pred_fallthru
      _
    %164 = vsyncpa [#allocation3], 1
    %165 = vsyncpa [#allocation4], 1
    %166 = vsyncpa [#allocation7], 1

</llo_original>
